<compile_context>
chip_gen: v6e
topology: v6e:2x2x1
jax: 0.10.0
libtpu: 0.0.40
codegen_flags: <defaults>
</compile_context>

<pallas_src>
import functools
import math

import jax
import jax.numpy as jnp
from jax import lax
from jax.experimental import pallas as pl
from jax.experimental.pallas import tpu as pltpu


def _round_up(x, m):
    return ((x + m - 1) // m) * m


def _pick_row_tile(m, max_tile=256):
    # Largest power-of-two row tile <= max_tile dividing M (256 keeps the
    # double-buffered x tiles comfortably inside v7x's 64 MiB VMEM as well).
    for t in (512, 256, 128, 64, 32, 16, 8):
        if t <= max_tile and t <= m and m % t == 0:
            return t
    return m


# ---------------------------------------------------------------------------
# Kernel 1: fused q/k/v/g projections + low-rank gk projection (one MXU pass).
# ---------------------------------------------------------------------------
def _proj_kernel(x_ref, w_fused_ref, w_gk2_ref, b_gk2_ref,
                 q_ref, k_ref, v_ref, g_ref, gk_ref, *, key_dim, value_dim):
    x = x_ref[...]                                        # bf16 [tm, D]
    fused = jnp.dot(x, w_fused_ref[...], preferred_element_type=jnp.float32)
    K, V = key_dim, value_dim
    q_ref[...] = fused[:, 0 * K:1 * K].astype(q_ref.dtype)
    k_ref[...] = fused[:, 1 * K:2 * K].astype(k_ref.dtype)
    v_ref[...] = fused[:, 2 * K:2 * K + V].astype(v_ref.dtype)
    g_ref[...] = fused[:, 2 * K + V:2 * K + 2 * V].astype(g_ref.dtype)
    # Low-rank gate path: the rank-R factor (padded to 128 lanes) came out of
    # the same wide matmul; only the tiny second GEMM remains, all in VMEM.
    low = fused[:, 2 * K + 2 * V:]                        # f32 [tm, R_pad]
    gk = jnp.dot(low.astype(w_gk2_ref.dtype), w_gk2_ref[...],
                 preferred_element_type=jnp.float32) + b_gk2_ref[...]
    gk_ref[...] = gk.astype(gk_ref.dtype)


def fused_projections(x2d, w_fused, w_gk2, b_gk2, key_dim, value_dim):
    M, D = x2d.shape
    NQ = w_fused.shape[1]
    R_pad = w_gk2.shape[0]
    tm = _pick_row_tile(M)
    kernel = functools.partial(_proj_kernel, key_dim=key_dim, value_dim=value_dim)
    out_shapes = (
        jax.ShapeDtypeStruct((M, key_dim), jnp.bfloat16),    # q
        jax.ShapeDtypeStruct((M, key_dim), jnp.bfloat16),    # k
        jax.ShapeDtypeStruct((M, value_dim), jnp.bfloat16),  # v
        jax.ShapeDtypeStruct((M, value_dim), jnp.bfloat16),  # g
        jax.ShapeDtypeStruct((M, key_dim), jnp.bfloat16),    # gk
    )
    # TODO(synk): for production D/NQ (e.g. 2048x6144) the resident fused
    # weight should be K-tiled (reduction grid axis + f32 accumulator) on v7x.
    return pl.pallas_call(
        kernel,
        out_shape=out_shapes,
        grid=(M // tm,),
        in_specs=[
            pl.BlockSpec((tm, D), lambda i: (i, 0)),          # x tile
            pl.BlockSpec((D, NQ), lambda i: (0, 0)),          # [Wq|Wk|Wv|Wg|Wgk1]
            pl.BlockSpec((R_pad, key_dim), lambda i: (0, 0)), # W_gk2 (padded rows)
            pl.BlockSpec((1, key_dim), lambda i: (0, 0)),     # b_gk2
        ],
        out_specs=[
            pl.BlockSpec((tm, key_dim), lambda i: (i, 0)),
            pl.BlockSpec((tm, key_dim), lambda i: (i, 0)),
            pl.BlockSpec((tm, value_dim), lambda i: (i, 0)),
            pl.BlockSpec((tm, value_dim), lambda i: (i, 0)),
            pl.BlockSpec((tm, key_dim), lambda i: (i, 0)),
        ],
        compiler_params=pltpu.CompilerParams(
            dimension_semantics=("parallel",),
            vmem_limit_bytes=64 * 1024 * 1024),
    )(x2d, w_fused, w_gk2, b_gk2)


# ---------------------------------------------------------------------------
# Kernel 2: chunked GLA recurrence + fused RMSNorm/swish gate + fused o_proj.
# ---------------------------------------------------------------------------
def _gla_kernel(q_ref, k_ref, v_ref, g_ref, gk_ref, wrms_ref, wo_ref,
                o_ref, s_ref, oint_ref, *, num_heads, head_k, head_v, scale,
                eps, normalizer):
    C = q_ref.shape[0]
    H, dk, dv = num_heads, head_k, head_v

    # Reset carried state S at the first chunk of every batch element.
    @pl.when(pl.program_id(1) == 0)
    def _():
        s_ref[...] = jnp.zeros_like(s_ref)

    # Causal structure generated in-kernel (no HBM input / DMA for the mask).
    row = lax.broadcasted_iota(jnp.int32, (C, C), 0)
    col = lax.broadcasted_iota(jnp.int32, (C, C), 1)
    causal = row >= col                                   # bool [C, C]
    tri = causal.astype(jnp.float32)                      # exact 0/1

    q = q_ref[...].astype(jnp.float32) * scale            # [C, H*dk]
    k = k_ref[...].astype(jnp.float32)                    # [C, H*dk]
    gk_raw = gk_ref[...].astype(jnp.float32)              # [C, H*dk]

    # logsigmoid(gk) / gate_logit_normalizer   (elementwise, VPU/EUP)
    logsig = jnp.minimum(gk_raw, 0.0) - jnp.log(1.0 + jnp.exp(-jnp.abs(gk_raw)))
    gk_log = logsig / normalizer                          # <= 0

    # Within-chunk inclusive prefix sum over time via tri @ gk_log (MXU).
    b = jnp.dot(tri, gk_log, preferred_element_type=jnp.float32)   # [C, H*dk]

    # Only one full-size exp pass; exp(-b) via approx reciprocal (EUP slot),
    # exp(b_last - b) via a broadcast multiply (VPU).
    exp_b = jnp.exp(b)                                    # in (0, 1]
    exp_nb = pl.reciprocal(exp_b, approx=True)            # exp(-b)
    exp_last = exp_b[C - 1:C, :]                          # [1, H*dk]

    q_tb = (q * exp_b).astype(jnp.bfloat16)               # intra scores + inter
    k_nb = k * exp_nb
    k_til = k_nb.astype(jnp.bfloat16)                     # intra-chunk keys
    k_dec = (k_nb * exp_last).astype(jnp.bfloat16)        # k*exp(b_last - b)
    decay_col = jnp.transpose(exp_last)                   # [H*dk, 1]

    w_rms = wrms_ref[...]                                 # f32 [1, dv]

    for h in range(H):                                    # H is small & static
        ks, ke = h * dk, (h + 1) * dk
        vs, ve = h * dv, (h + 1) * dv
        vh = v_ref[:, vs:ve]                              # bf16 [C, dv]
        s_h = s_ref[ks:ke, :]                             # f32 [dk, dv]

        # Intra-chunk causal scores; contraction on the last dim of both
        # operands (no .T / XLU relayout).
        scores = lax.dot_general(
            q_tb[:, ks:ke], k_til[:, ks:ke],
            dimension_numbers=(((1,), (1,)), ((), ())),
            preferred_element_type=jnp.float32)           # [C, C]
        scores = jnp.where(causal, scores, 0.0)           # select: inf*0 safe

        oh = jnp.dot(scores.astype(jnp.bfloat16), vh,
                     preferred_element_type=jnp.float32)  # [C, dv]
        oh = oh + jnp.dot(q_tb[:, ks:ke], s_h.astype(jnp.bfloat16),
                          preferred_element_type=jnp.float32)

        # State update:  S <- diag(exp(b_last)) S + (k*exp(b_last-b))^T v,
        # with the transpose folded into the dot_general contraction dims.
        s_upd = lax.dot_general(
            k_dec[:, ks:ke], vh,
            dimension_numbers=(((0,), (0,)), ((), ())),
            preferred_element_type=jnp.float32)           # [dk, dv]
        s_ref[ks:ke, :] = s_h * decay_col[ks:ke, :] + s_upd

        # Fused per-head RMSNorm (over head_v_dim) + swish output gate,
        # written into a lane-packed bf16 VMEM buffer (bounded live ranges).
        rms = lax.rsqrt(jnp.mean(oh * oh, axis=-1, keepdims=True) + eps)
        oh = oh * rms * w_rms
        gh = g_ref[:, vs:ve].astype(jnp.float32)
        oh = oh * gh * jax.nn.sigmoid(gh)
        oint_ref[:, vs:ve] = oh.astype(oint_ref.dtype)

    # Single fused output projection for all heads: [C, H*dv] @ [H*dv, D].
    out = jnp.dot(oint_ref[...], wo_ref[...], preferred_element_type=jnp.float32)
    o_ref[...] = out.astype(o_ref.dtype)


def gla_chunked(q, k, v, g, gk, w_rms, w_o, *, num_heads, head_k, head_v,
                chunk, eps, normalizer, out_dtype=jnp.bfloat16):
    B, L, key_dim = q.shape
    value_dim = v.shape[-1]
    D = w_o.shape[-1]
    C = chunk
    kernel = functools.partial(
        _gla_kernel, num_heads=num_heads, head_k=head_k, head_v=head_v,
        scale=float(head_k) ** -0.5, eps=eps, normalizer=normalizer)
    return pl.pallas_call(
        kernel,
        out_shape=jax.ShapeDtypeStruct((B, L, D), out_dtype),   # bf16 writeback
        grid=(B, L // C),
        in_specs=[
            pl.BlockSpec((None, C, key_dim), lambda b, c: (b, c, 0)),    # q
            pl.BlockSpec((None, C, key_dim), lambda b, c: (b, c, 0)),    # k
            pl.BlockSpec((None, C, value_dim), lambda b, c: (b, c, 0)),  # v
            pl.BlockSpec((None, C, value_dim), lambda b, c: (b, c, 0)),  # g
            pl.BlockSpec((None, C, key_dim), lambda b, c: (b, c, 0)),    # gk
            pl.BlockSpec((1, head_v), lambda b, c: (0, 0)),              # rms w
            pl.BlockSpec((value_dim, D), lambda b, c: (0, 0)),           # W_o
        ],
        out_specs=pl.BlockSpec((None, C, D), lambda b, c: (b, c, 0)),
        scratch_shapes=[
            pltpu.VMEM((num_heads * head_k, head_v), jnp.float32),  # carried S
            pltpu.VMEM((C, value_dim), jnp.bfloat16),               # gated acts
        ],
        compiler_params=pltpu.CompilerParams(
            dimension_semantics=("parallel", "arbitrary"),
            vmem_limit_bytes=64 * 1024 * 1024),
    )(q, k, v, g, gk, w_rms, w_o)


# ---------------------------------------------------------------------------
# Full forward (only reshapes / zero-pads in the wrapper — no transposes)
# ---------------------------------------------------------------------------
def gla_forward(x, params, num_heads, *, gate_logit_normalizer=16, eps=1e-5,
                chunk_size=64):
    B, L, D = x.shape
    key_dim = params['w_q'].shape[1]
    value_dim = params['w_v'].shape[1]
    dk = key_dim // num_heads
    dv = value_dim // num_heads

    # Chunk selection: keep C a multiple of 8 (sublane constraint) and PAD the
    # sequence to a multiple of C instead of collapsing the chunk via gcd.
    C = min(chunk_size, _round_up(L, 8))
    C = _round_up(C, 8)
    L_pad = _round_up(L, C)

    cdt = jnp.bfloat16
    if L_pad != L:
        x = jnp.pad(x, ((0, 0), (0, L_pad - L), (0, 0)))
    x2d = x.reshape(B * L_pad, D).astype(cdt)

    # Fold the low-rank gate's first factor into the single wide weight; pad
    # its rank to 128 lanes (zero cols/rows) so the intermediate is lane-dense.
    R = params['w_gk1'].shape[1]
    R_pad = _round_up(max(R, 128), 128)
    w_gk1 = jnp.pad(params['w_gk1'], ((0, 0), (0, R_pad - R)))
    w_gk2 = jnp.pad(params['w_gk2'], ((0, R_pad - R), (0, 0)))
    w_fused = jnp.concatenate(
        [params['w_q'], params['w_k'], params['w_v'], params['w_g'], w_gk1],
        axis=1).astype(cdt)

    q, k, v, g, gk = fused_projections(
        x2d, w_fused, w_gk2.astype(cdt),
        params['b_gk2'].reshape(1, key_dim).astype(jnp.float32),
        key_dim, value_dim)

    q = q.reshape(B, L_pad, key_dim)
    k = k.reshape(B, L_pad, key_dim)
    v = v.reshape(B, L_pad, value_dim)
    g = g.reshape(B, L_pad, value_dim)
    gk = gk.reshape(B, L_pad, key_dim)

    w_rms = params['w_rms'].reshape(1, dv).astype(jnp.float32)
    w_o = params['w_o'].astype(cdt)

    out = gla_chunked(q, k, v, g, gk, w_rms, w_o,
                      num_heads=num_heads, head_k=dk, head_v=dv, chunk=C,
                      eps=eps, normalizer=float(gate_logit_normalizer))
    return out[:, :L]


# ---------------------------------------------------------------------------
# Pure-JAX f32 reference (naive sequential GLA recurrence) for validation
# ---------------------------------------------------------------------------
def ref_forward(x, params, num_heads, *, gate_logit_normalizer=16, eps=1e-5):
    B, L, D = x.shape
    q = x @ params['w_q']
    k = x @ params['w_k']
    v = x @ params['w_v']
    g = x @ params['w_g']
    gk = (x @ params['w_gk1']) @ params['w_gk2'] + params['b_gk2']

    dk = q.shape[-1] // num_heads
    dv = v.shape[-1] // num_heads

    def split(t, d):
        return t.reshape(B, L, num_heads, d).transpose(0, 2, 1, 3)

    q, k, gk = split(q, dk), split(k, dk), split(gk, dk)
    v, g = split(v, dv), split(g, dv)

    gk = jax.nn.log_sigmoid(gk) / gate_logit_normalizer
    a = jnp.exp(gk)
    scale = dk ** -0.5

    def step(S, inp):
        q_t, k_t, v_t, a_t = inp
        S = S * a_t[..., None] + k_t[..., None] * v_t[..., None, :]
        o_t = jnp.einsum('bhk,bhkv->bhv', q_t * scale, S)
        return S, o_t

    S0 = jnp.zeros((B, num_heads, dk, dv), jnp.float32)
    xs = tuple(t.transpose(2, 0, 1, 3) for t in (q, k, v, a))
    _, o = lax.scan(step, S0, xs)
    o = o.transpose(1, 2, 0, 3)                                 # [B,H,L,dv]

    rms = lax.rsqrt(jnp.mean(o * o, axis=-1, keepdims=True) + eps)
    o = o * rms * params['w_rms'].reshape(1, 1, 1, dv)
    o = o * g * jax.nn.sigmoid(g)
    o = o.transpose(0, 2, 1, 3).reshape(B, L, -1)
    return o @ params['w_o']


if __name__ == "__main__":
    # Small config consistent with the module: d_model=64, expand_k=0.5,
    # expand_v=1.0, num_heads=2, gate_low_rank_dim=16  =>  dk=16, dv=32.
    # L=16 with chunk_size=8 => two chunks, exercising the carried state.
    B, L, D = 2, 16, 64
    num_heads = 2
    key_dim = int(D * 0.5)      # 32
    value_dim = int(D * 1.0)    # 64
    low_rank = 16
    dv = value_dim // num_heads

    key = jax.random.PRNGKey(0)
    ks = jax.random.split(key, 8)
    s = 0.1  # deterministic xavier-ish scale
    params = {
        'w_q':   jax.random.normal(ks[0], (D, key_dim), jnp.float32) * s,
        'w_k':   jax.random.normal(ks[1], (D, key_dim), jnp.float32) * s,
        'w_v':   jax.random.normal(ks[2], (D, value_dim), jnp.float32) * s,
        'w_g':   jax.random.normal(ks[3], (D, value_dim), jnp.float32) * s,
        'w_gk1': jax.random.normal(ks[4], (D, low_rank), jnp.float32) * s,
        'w_gk2': jax.random.normal(ks[5], (low_rank, key_dim), jnp.float32) * s,
        'b_gk2': jnp.zeros((key_dim,), jnp.float32),       # bias init = zeros
        'w_o':   jax.random.normal(ks[6], (value_dim, D), jnp.float32) * s,
        'w_rms': jnp.ones((1, dv), jnp.float32),           # RMSNorm weight = 1
    }
    x = jax.random.normal(ks[7], (B, L, D), jnp.float32)

    out = jax.block_until_ready(gla_forward(x, params, num_heads, chunk_size=8))
    ref = ref_forward(x, params, num_heads)

    assert out.shape == (B, L, D), out.shape
    assert bool(jnp.all(jnp.isfinite(out.astype(jnp.float32))))
    err = float(jnp.max(jnp.abs(out.astype(jnp.float32) - ref)))
    assert err < 5e-2, err   # bf16 compute/output vs f32 reference
    print("KERNEL_OK")
</pallas_src>

<mosaic_0001>
module attributes {stable_mosaic.version = 11 : i64} {
  func.func @_proj_kernel(%arg0: i32, %arg1: memref<32x64xbf16, #tpu.memory_space<vmem>>, %arg2: memref<64x320xbf16, #tpu.memory_space<vmem>>, %arg3: memref<128x32xbf16, #tpu.memory_space<vmem>>, %arg4: memref<1x32xf32, #tpu.memory_space<vmem>>, %arg5: memref<32x32xbf16, #tpu.memory_space<vmem>>, %arg6: memref<32x32xbf16, #tpu.memory_space<vmem>>, %arg7: memref<32x64xbf16, #tpu.memory_space<vmem>>, %arg8: memref<32x64xbf16, #tpu.memory_space<vmem>>, %arg9: memref<32x32xbf16, #tpu.memory_space<vmem>>) attributes {dimension_semantics = [#tpu.dimension_semantics<parallel>], iteration_bounds = array<i64: 1>, scalar_prefetch = 0 : i64, scratch_operands = 0 : i64, tpu.core_type = #tpu.core_type<tc>, window_params = [{transform_indices = @transform_0, window_bounds = array<i64: 32, 64>}, {pipeline_mode = #tpu.pipeline_mode<synchronous>, transform_indices = @transform_1, window_bounds = array<i64: 64, 320>}, {pipeline_mode = #tpu.pipeline_mode<synchronous>, transform_indices = @transform_2, window_bounds = array<i64: 128, 32>}, {pipeline_mode = #tpu.pipeline_mode<synchronous>, transform_indices = @transform_3, window_bounds = array<i64: 1, 32>}, {transform_indices = @transform_4, window_bounds = array<i64: 32, 32>}, {transform_indices = @transform_5, window_bounds = array<i64: 32, 32>}, {transform_indices = @transform_6, window_bounds = array<i64: 32, 64>}, {transform_indices = @transform_7, window_bounds = array<i64: 32, 64>}, {transform_indices = @transform_8, window_bounds = array<i64: 32, 32>}]} {
    %c0 = arith.constant 0 : index
    %c0_0 = arith.constant 0 : index
    %0 = vector.load %arg1[%c0, %c0_0] : memref<32x64xbf16, #tpu.memory_space<vmem>>, vector<32x64xbf16>
    %c0_1 = arith.constant 0 : index
    %c0_2 = arith.constant 0 : index
    %1 = vector.load %arg2[%c0_1, %c0_2] : memref<64x320xbf16, #tpu.memory_space<vmem>>, vector<64x320xbf16>
    %cst = arith.constant dense<0.000000e+00> : vector<32x320xf32>
    %2 = tpu.matmul %0, %1, %cst {dimension_numbers = #tpu.dot_dimension_numbers<[1], [0], [0], [1], [0, 0, 1, 1], [], []>} : vector<32x64xbf16>, vector<64x320xbf16>, vector<32x320xf32> -> vector<32x320xf32>
    %3 = vector.extract_strided_slice %2 {offsets = [0, 0], sizes = [32, 32], strides = [1, 1]} : vector<32x320xf32> to vector<32x32xf32>
    %4 = arith.truncf %3 : vector<32x32xf32> to vector<32x32xbf16>
    %c0_3 = arith.constant 0 : index
    %c0_4 = arith.constant 0 : index
    %5 = vector.load %arg5[%c0_3, %c0_4] : memref<32x32xbf16, #tpu.memory_space<vmem>>, vector<32x32xbf16>
    tpu.vector_store %arg5[%c0_3, %c0_4], %4 {strides = array<i32>} : memref<32x32xbf16, #tpu.memory_space<vmem>>, vector<32x32xbf16>,
    %6 = vector.extract_strided_slice %2 {offsets = [0, 32], sizes = [32, 32], strides = [1, 1]} : vector<32x320xf32> to vector<32x32xf32>
    %7 = arith.truncf %6 : vector<32x32xf32> to vector<32x32xbf16>
    %c0_5 = arith.constant 0 : index
    %c0_6 = arith.constant 0 : index
    %8 = vector.load %arg6[%c0_5, %c0_6] : memref<32x32xbf16, #tpu.memory_space<vmem>>, vector<32x32xbf16>
    tpu.vector_store %arg6[%c0_5, %c0_6], %7 {strides = array<i32>} : memref<32x32xbf16, #tpu.memory_space<vmem>>, vector<32x32xbf16>,
    %9 = vector.extract_strided_slice %2 {offsets = [0, 64], sizes = [32, 64], strides = [1, 1]} : vector<32x320xf32> to vector<32x64xf32>
    %10 = arith.truncf %9 : vector<32x64xf32> to vector<32x64xbf16>
    %c0_7 = arith.constant 0 : index
    %c0_8 = arith.constant 0 : index
    %11 = vector.load %arg7[%c0_7, %c0_8] : memref<32x64xbf16, #tpu.memory_space<vmem>>, vector<32x64xbf16>
    tpu.vector_store %arg7[%c0_7, %c0_8], %10 {strides = array<i32>} : memref<32x64xbf16, #tpu.memory_space<vmem>>, vector<32x64xbf16>,
    %12 = vector.extract_strided_slice %2 {offsets = [0, 128], sizes = [32, 64], strides = [1, 1]} : vector<32x320xf32> to vector<32x64xf32>
    %13 = arith.truncf %12 : vector<32x64xf32> to vector<32x64xbf16>
    %c0_9 = arith.constant 0 : index
    %c0_10 = arith.constant 0 : index
    %14 = vector.load %arg8[%c0_9, %c0_10] : memref<32x64xbf16, #tpu.memory_space<vmem>>, vector<32x64xbf16>
    tpu.vector_store %arg8[%c0_9, %c0_10], %13 {strides = array<i32>} : memref<32x64xbf16, #tpu.memory_space<vmem>>, vector<32x64xbf16>,
    %15 = vector.extract_strided_slice %2 {offsets = [0, 192], sizes = [32, 128], strides = [1, 1]} : vector<32x320xf32> to vector<32x128xf32>
    %16 = arith.truncf %15 : vector<32x128xf32> to vector<32x128xbf16>
    %c0_11 = arith.constant 0 : index
    %c0_12 = arith.constant 0 : index
    %17 = vector.load %arg3[%c0_11, %c0_12] : memref<128x32xbf16, #tpu.memory_space<vmem>>, vector<128x32xbf16>
    %cst_13 = arith.constant dense<0.000000e+00> : vector<32x32xf32>
    %18 = tpu.matmul %16, %17, %cst_13 {dimension_numbers = #tpu.dot_dimension_numbers<[1], [0], [0], [1], [0, 0, 1, 1], [], []>} : vector<32x128xbf16>, vector<128x32xbf16>, vector<32x32xf32> -> vector<32x32xf32>
    %c0_14 = arith.constant 0 : index
    %c0_15 = arith.constant 0 : index
    %19 = vector.load %arg4[%c0_14, %c0_15] : memref<1x32xf32, #tpu.memory_space<vmem>>, vector<1x32xf32>
    %20 = vector.broadcast %19 : vector<1x32xf32> to vector<32x32xf32>
    %21 = arith.addf %18, %20 : vector<32x32xf32>
    %22 = arith.truncf %21 : vector<32x32xf32> to vector<32x32xbf16>
    %c0_16 = arith.constant 0 : index
    %c0_17 = arith.constant 0 : index
    %23 = vector.load %arg9[%c0_16, %c0_17] : memref<32x32xbf16, #tpu.memory_space<vmem>>, vector<32x32xbf16>
    tpu.vector_store %arg9[%c0_16, %c0_17], %22 {strides = array<i32>} : memref<32x32xbf16, #tpu.memory_space<vmem>>, vector<32x32xbf16>,
    return
  }
  func.func @transform_0(%arg0: i32) -> (i32, i32) {
    %c0_i32 = arith.constant 0 : i32
    %c0_i32_0 = arith.constant 0 : i32
    return %arg0, %c0_i32 : i32, i32
  }
  func.func @transform_1(%arg0: i32) -> (i32, i32) {
    %c0_i32 = arith.constant 0 : i32
    %c0_i32_0 = arith.constant 0 : i32
    %c0_i32_1 = arith.constant 0 : i32
    return %c0_i32, %c0_i32_0 : i32, i32
  }
  func.func @transform_2(%arg0: i32) -> (i32, i32) {
    %c0_i32 = arith.constant 0 : i32
    %c0_i32_0 = arith.constant 0 : i32
    %c0_i32_1 = arith.constant 0 : i32
    return %c0_i32, %c0_i32_0 : i32, i32
  }
  func.func @transform_3(%arg0: i32) -> (i32, i32) {
    %c0_i32 = arith.constant 0 : i32
    %c0_i32_0 = arith.constant 0 : i32
    %c0_i32_1 = arith.constant 0 : i32
    return %c0_i32, %c0_i32_0 : i32, i32
  }
  func.func @transform_4(%arg0: i32) -> (i32, i32) {
    %c0_i32 = arith.constant 0 : i32
    %c0_i32_0 = arith.constant 0 : i32
    return %arg0, %c0_i32 : i32, i32
  }
  func.func @transform_5(%arg0: i32) -> (i32, i32) {
    %c0_i32 = arith.constant 0 : i32
    %c0_i32_0 = arith.constant 0 : i32
    return %arg0, %c0_i32 : i32, i32
  }
  func.func @transform_6(%arg0: i32) -> (i32, i32) {
    %c0_i32 = arith.constant 0 : i32
    %c0_i32_0 = arith.constant 0 : i32
    return %arg0, %c0_i32 : i32, i32
  }
  func.func @transform_7(%arg0: i32) -> (i32, i32) {
    %c0_i32 = arith.constant 0 : i32
    %c0_i32_0 = arith.constant 0 : i32
    return %arg0, %c0_i32 : i32, i32
  }
  func.func @transform_8(%arg0: i32) -> (i32, i32) {
    %c0_i32 = arith.constant 0 : i32
    %c0_i32_0 = arith.constant 0 : i32
    return %arg0, %c0_i32 : i32, i32
  }
}

</mosaic_0001>

<llo_original>
// kernel: tpu_custom_call.1
$region0: #{tpu_custom_call.1}
  #allocation0 [shape = 'u32[]', space=smem, size = 0x4, offset = 0x4, fixed_abs, tag = 'smem constant byte address 0x4 - core index']
  #allocation1 [shape = 'u32[144,128]{1,0:T(1,128)}', space=vmem, size = 0x12000, scoped, tag = 'internal scratch']
  %s0 = inlined_call_operand.vmem [shape: bf16[32,64], index: 0, kind: input, shape index: {}]
  %s1 = inlined_call_operand.hbm [shape: bf16[64,320], index: 1, kind: input, shape index: {}]
  %s2 = inlined_call_operand.vmem [shape: bf16[128,32], index: 2, kind: input, shape index: {}]
  %s3 = inlined_call_operand.vmem [shape: f32[1,32], index: 3, kind: input, shape index: {}]
  %s4 = inlined_call_operand.hbm [shape: bf16[32,32], index: 4, kind: output, shape index: {0}]
  %s5 = inlined_call_operand.hbm [shape: bf16[32,32], index: 5, kind: output, shape index: {1}]
  %s6 = inlined_call_operand.hbm [shape: bf16[32,64], index: 6, kind: output, shape index: {2}]
  %s7 = inlined_call_operand.hbm [shape: bf16[32,64], index: 7, kind: output, shape index: {3}]
  %s8 = inlined_call_operand.hbm [shape: bf16[32,32], index: 8, kind: output, shape index: {4}]
  %9 = xla_tuple %s4, %s5, %s6, %s7, %s8
  %s10 = sld [smem:[#allocation0]]
  $region62: #{tpu_custom_call.1} parent=0
    _
  %s12 = ssub.s32 1, %s10
  %s13 = scalar_select 0, %s12, %s10
  $region1: #{tpu_custom_call.1} parent=0
    #allocation2 [shape = 'u8[49152]{0}', space=vmem, size = 0xc000, scoped, tag = 'input window, operand 1, single buffered']
    #allocation3 [shape = 's32[1]{0}', space=sflag, size = 0x4, scoped, tag = 'scoped memory for tpu_custom_call.1']
    #allocation4 [shape = 's32[1]{0}', space=sflag, size = 0x4, scoped, tag = 'scoped memory for tpu_custom_call.1']
    #allocation5 [shape = 'u8[8192]{0}', space=vmem, size = 0x2000, scoped, tag = 'output window, operand 0, single buffered']
    #allocation6 [shape = 'u8[8192]{0}', space=vmem, size = 0x2000, scoped, tag = 'output window, operand 1, single buffered']
    #allocation7 [shape = 's32[1]{0}', space=sflag, size = 0x4, scoped, tag = 'scoped memory for tpu_custom_call.1']
    #allocation8 [shape = 'u8[8192]{0}', space=vmem, size = 0x2000, scoped, tag = 'output window, operand 2, single buffered']
    #allocation9 [shape = 'u8[8192]{0}', space=vmem, size = 0x2000, scoped, tag = 'output window, operand 3, single buffered']
    #allocation10 [shape = 's32[1]{0}', space=sflag, size = 0x4, scoped, tag = 'scoped memory for tpu_custom_call.1']
    #allocation11 [shape = 'u8[8192]{0}', space=vmem, size = 0x2000, scoped, tag = 'output window, operand 4, single buffered']
    %14 = vsyncpa [#allocation3], 0
    %15 = vsyncpa [#allocation4], 0
    %16 = vsyncpa [#allocation7], 0
    %17 = vsyncpa [#allocation10], 0
    // Predicated region
    $region2: #{tpu_custom_call.1} parent=1 // pred_check
      _
    $region3: #{tpu_custom_call.1} parent=1 // pred_check_branch
      %19 = sbr.rel (0) target = $region5
    $region4: #{tpu_custom_call.1} parent=1 // pred_region
      _
    $region5: #{tpu_custom_call.1} parent=1 // pred_fallthru
      _
    // Predicated region
    $region6: #{tpu_custom_call.1} parent=1 // pred_check
      _
    $region7: #{tpu_custom_call.1} parent=1 // pred_check_branch
      %21 = sbr.rel (0) target = $region9
    $region8: #{tpu_custom_call.1} parent=1 // pred_region
      %s23 = ssub.s32 1536, 1536
      %24 = vsyncadd [#allocation3], %s23
      %s25 = sshll.u32 [#allocation2], 4
      %s26 = int_to_ptr.vmem [resolvable:$true] %s25
      %31 = dma.hbm_to_vmem [thread:$0]  %s1, 1536, %s26, [#allocation3], 192, 192, 12
    $region9: #{tpu_custom_call.1} parent=1 // pred_fallthru
      _
    // Predicated region
    $region10: #{tpu_custom_call.1} parent=1 // pred_check
      _
    $region11: #{tpu_custom_call.1} parent=1 // pred_check_branch
      %33 = sbr.rel (0) target = $region13
    $region12: #{tpu_custom_call.1} parent=1 // pred_region
      _
    $region13: #{tpu_custom_call.1} parent=1 // pred_fallthru
      _
    // Predicated region
    $region14: #{tpu_custom_call.1} parent=1 // pred_check
      _
    $region15: #{tpu_custom_call.1} parent=1 // pred_check_branch
      %35 = sbr.rel (0) target = $region17
    $region16: #{tpu_custom_call.1} parent=1 // pred_region
      _
    $region17: #{tpu_custom_call.1} parent=1 // pred_fallthru
      _
    // Predicated region
    $region18: #{tpu_custom_call.1} parent=1 // pred_check
      _
    $region19: #{tpu_custom_call.1} parent=1 // pred_check_branch
      %37 = sbr.rel (0) target = $region21
    $region20: #{tpu_custom_call.1} parent=1 // pred_region
      %38 = dma.done [#allocation3], 1536
    $region21: #{tpu_custom_call.1} parent=1 // pred_fallthru
      _
    %v40 = vld [vmem:[%s0] sm:$0xf]
    %v41 = vld [vmem:[%s0 + $0x4] sm:$0xf]
    %v42 = vld [vmem:[%s0 + $0x8] sm:$0xf]
    %v43 = vld [vmem:[%s0 + $0xc] sm:$0xf]
    %v44 = vld [vmem:[#allocation2] sm:$0xff]
    %v45 = vld [vmem:[#allocation2 + $0x8] sm:$0xf]
    %v46 = vld [vmem:[#allocation2 + $0xc] sm:$0xff]
    %v47 = vld [vmem:[#allocation2 + $0x14] sm:$0xf]
    %v48 = vld [vmem:[#allocation2 + $0x18] sm:$0xff]
    %v49 = vld [vmem:[#allocation2 + $0x20] sm:$0xf]
    %v50 = vld [vmem:[#allocation2 + $0x24] sm:$0xff]
    %v51 = vld [vmem:[#allocation2 + $0x2c] sm:$0xf]
    %v52 = vld [vmem:[#allocation2 + $0x30] sm:$0xff]
    %v53 = vld [vmem:[#allocation2 + $0x38] sm:$0xf]
    %v54 = vld [vmem:[#allocation2 + $0x3c] sm:$0xff]
    %v55 = vld [vmem:[#allocation2 + $0x44] sm:$0xf]
    %v56 = vld [vmem:[#allocation2 + $0x48] sm:$0xff]
    %v57 = vld [vmem:[#allocation2 + $0x50] sm:$0xf]
    %v58 = vld [vmem:[#allocation2 + $0x54] sm:$0xff]
    %v59 = vld [vmem:[#allocation2 + $0x5c] sm:$0xf]
    %v64 = vunpack.c.l.b16 %v40
    %v65 = vunpack.c.l.b16 %v41
    %v66 = vunpack.c.l.b16 %v42
    %v67 = vunpack.c.l.b16 %v43
    %v68 = vpack.c.b16 %v65, %v64
    %v69 = vpack.c.b16 %v67, %v66
    %v86 = vunpack.c.l.b16 %v44
    %v87 = vunpack.c.h.b16 %v44
    %v88 = vunpack.c.l.b16 %v45
    %v89 = vunpack.c.l.b16 %v46
    %v90 = vunpack.c.h.b16 %v46
    %v91 = vunpack.c.l.b16 %v47
    %v92 = vunpack.c.l.b16 %v48
    %v93 = vunpack.c.h.b16 %v48
    %v94 = vunpack.c.l.b16 %v49
    %v95 = vunpack.c.l.b16 %v50
    %v96 = vunpack.c.h.b16 %v50
    %v97 = vunpack.c.l.b16 %v51
    %v98 = vunpack.c.l.b16 %v52
    %v99 = vunpack.c.h.b16 %v52
    %v100 = vunpack.c.l.b16 %v53
    %v101 = vunpack.c.l.b16 %v54
    %v102 = vunpack.c.h.b16 %v54
    %v103 = vunpack.c.l.b16 %v55
    %v104 = vunpack.c.l.b16 %v56
    %v105 = vunpack.c.h.b16 %v56
    %v106 = vunpack.c.l.b16 %v57
    %v107 = vunpack.c.l.b16 %v58
    %v108 = vunpack.c.h.b16 %v58
    %v109 = vunpack.c.l.b16 %v59
    %v110 = vpack.c.b16 %v89, %v86
    %v111 = vpack.c.b16 %v90, %v87
    %v112 = vpack.c.b16 %v91, %v88
    %v113 = vpack.c.b16 %v95, %v92
    %v114 = vpack.c.b16 %v96, %v93
    %v115 = vpack.c.b16 %v97, %v94
    %v116 = vpack.c.b16 %v101, %v98
    %v117 = vpack.c.b16 %v102, %v99
    %v118 = vpack.c.b16 %v103, %v100
    %v119 = vpack.c.b16 %v107, %v104
    %v120 = vpack.c.b16 %v108, %v105
    %v121 = vpack.c.b16 %v109, %v106
    %vm134 = vcmask 523264
    %v136 = vsel %vm134, %v68, 0
    %v139 = vsel %vm134, %v69, 0
    %141 = vmatprep.subr.bf16.mxu0 0
    %142 = vmatpush1.bf16.msra.mxu0 0
    %143 = vmatprep.subr.bf16.mxu0 0
    %144 = vmatpush1.bf16.msra.mxu0 0
    %145 = vmatprep.subr.bf16.mxu0 0
    %146 = vmatpush1.bf16.msra.mxu0 0
    %147 = vmatprep.subr.bf16.mxu0 0
    %148 = vmatpush1.bf16.msra.mxu0 0
    %149 = vmatprep.subr.bf16.mxu0 %v120
    %150 = vmatpush1.bf16.msra.mxu0 %v119
    %151 = vmatprep.subr.bf16.mxu0 %v117
    %152 = vmatpush1.bf16.msra.mxu0 %v116
    %153 = vmatprep.subr.bf16.mxu0 %v114
    %154 = vmatpush1.bf16.msra.mxu0 %v113
    %155 = vmatprep.subr.bf16.mxu0 %v111
    %156 = vmatpush1.bf16.msra.mxu0 %v110
    %157 = vmatprep.subr.bf16.mxu0 0
    %158 = vmatpush2.bf16.msra.mxu0 0
    %159 = vmatprep.subr.bf16.mxu0 0
    %160 = vmatpush2.bf16.msra.mxu0 0
    %161 = vmatprep.subr.bf16.mxu0 0
    %162 = vmatpush2.bf16.msra.mxu0 0
    %163 = vmatprep.subr.bf16.mxu0 0
    %164 = vmatpush2.bf16.msra.mxu0 0
    %165 = vmatprep.subr.bf16.mxu0 0
    %166 = vmatpush2.bf16.msra.mxu0 0
    %167 = vmatprep.subr.bf16.mxu0 0
    %168 = vmatpush2.bf16.msra.mxu0 0
    %169 = vmatprep.subr.bf16.mxu0 0
    %170 = vmatpush2.bf16.msra.mxu0 0
    %171 = vmatprep.subr.bf16.mxu0 0
    %172 = vmatpush2.bf16.msra.mxu0 0
    %173 = vmatprep.mubr.bf16.mxu0 0
    %174 = vmatmul.mubr.bf16.gmra.mxu0 %v136
    %v175 = vpop.f32.mrf.mxu0
    %v176 = vadd.f32 0.0, %v175
    %v177 = vpop.f32.mrf.mxu0
    %v178 = vadd.f32 0.0, %v177
    %v179 = vpop.f32.mrf.mxu0
    %v180 = vadd.f32 0.0, %v179
    %v181 = vpop.f32.mrf.mxu0
    %v182 = vadd.f32 0.0, %v181
    %183 = vmatprep.mubr.bf16.mxu0 0
    %184 = vmatmul.mubr.bf16.gmra.mxu0 %v139
    %v185 = vpop.f32.mrf.mxu0
    %v186 = vadd.f32 0.0, %v185
    %v187 = vpop.f32.mrf.mxu0
    %v188 = vadd.f32 0.0, %v187
    %v189 = vpop.f32.mrf.mxu0
    %v190 = vadd.f32 0.0, %v189
    %v191 = vpop.f32.mrf.mxu0
    %v192 = vadd.f32 0.0, %v191
    %193 = vdwg.mxu0
    %194 = vmatprep.subr.bf16.mxu0 0
    %195 = vmatpush1.bf16.msra.mxu0 0
    %196 = vmatprep.subr.bf16.mxu0 0
    %197 = vmatpush1.bf16.msra.mxu0 0
    %198 = vmatprep.subr.bf16.mxu0 0
    %199 = vmatpush1.bf16.msra.mxu0 0
    %200 = vmatprep.subr.bf16.mxu0 0
    %201 = vmatpush1.bf16.msra.mxu0 0
    %202 = vmatprep.subr.bf16.mxu0 0
    %203 = vmatpush1.bf16.msra.mxu0 %v121
    %204 = vmatprep.subr.bf16.mxu0 0
    %205 = vmatpush1.bf16.msra.mxu0 %v118
    %206 = vmatprep.subr.bf16.mxu0 0
    %207 = vmatpush1.bf16.msra.mxu0 %v115
    %208 = vmatprep.subr.bf16.mxu0 0
    %209 = vmatpush1.bf16.msra.mxu0 %v112
    %210 = vmatprep.subr.bf16.mxu0 0
    %211 = vmatpush2.bf16.msra.mxu0 0
    %212 = vmatprep.subr.bf16.mxu0 0
    %213 = vmatpush2.bf16.msra.mxu0 0
    %214 = vmatprep.subr.bf16.mxu0 0
    %215 = vmatpush2.bf16.msra.mxu0 0
    %216 = vmatprep.subr.bf16.mxu0 0
    %217 = vmatpush2.bf16.msra.mxu0 0
    %218 = vmatprep.subr.bf16.mxu0 0
    %219 = vmatpush2.bf16.msra.mxu0 0
    %220 = vmatprep.subr.bf16.mxu0 0
    %221 = vmatpush2.bf16.msra.mxu0 0
    %222 = vmatprep.subr.bf16.mxu0 0
    %223 = vmatpush2.bf16.msra.mxu0 0
    %224 = vmatprep.subr.bf16.mxu0 0
    %225 = vmatpush2.bf16.msra.mxu0 0
    %226 = vmatprep.mubr.bf16.mxu0 0
    %227 = vmatmul.mubr.bf16.gmra.mxu0 %v136
    %v228 = vpop.f32.mrf.mxu0
    %v229 = vadd.f32 0.0, %v228
    %v230 = vpop.f32.mrf.mxu0
    %v231 = vpop.f32.mrf.mxu0
    %v232 = vadd.f32 0.0, %v231
    %v233 = vpop.f32.mrf.mxu0
    %234 = vmatprep.mubr.bf16.mxu0 0
    %235 = vmatmul.mubr.bf16.gmra.mxu0 %v139
    %v236 = vpop.f32.mrf.mxu0
    %v237 = vadd.f32 0.0, %v236
    %v238 = vpop.f32.mrf.mxu0
    %v239 = vpop.f32.mrf.mxu0
    %v240 = vadd.f32 0.0, %v239
    %v241 = vpop.f32.mrf.mxu0
    %242 = vdwg.mxu0
    %v243 = vpack.c.bf16 %v180, %v176
    %v244 = vpack.c.bf16 %v190, %v186
    %v247 = vunpack.c.l.b16 %v243
    %v248 = vunpack.c.h.b16 %v243
    %v249 = vunpack.c.l.b16 %v244
    %v250 = vunpack.c.h.b16 %v244
    %v251 = vpack.c.b16 %v247, %v247
    %v252 = vpack.c.b16 %v248, %v248
    %v253 = vpack.c.b16 %v249, %v249
    %v254 = vpack.c.b16 %v250, %v250
    %vm259 = vcmask 257024
    %260 = vst.msk [vmem:[#allocation5] sm:$0xf] %vm259, %v251
    %261 = vst.msk [vmem:[#allocation5 + $0x4] sm:$0xf] %vm259, %v252
    %262 = vst.msk [vmem:[#allocation5 + $0x8] sm:$0xf] %vm259, %v253
    %263 = vst.msk [vmem:[#allocation5 + $0xc] sm:$0xf] %vm259, %v254
    %264 = vrot.lane.b32.xlu0 %v251, 96
    %v265 = vpop.permute.xlu0 %264
    %266 = vrot.lane.b32.xlu0 %v252, 96
    %v267 = vpop.permute.xlu0 %266
    %268 = vrot.lane.b32.xlu0 %v253, 96
    %v269 = vpop.permute.xlu0 %268
    %270 = vrot.lane.b32.xlu0 %v254, 96
    %v271 = vpop.permute.xlu0 %270
    %276 = vst.msk [vmem:[#allocation6] sm:$0xf] %vm259, %v265
    %277 = vst.msk [vmem:[#allocation6 + $0x4] sm:$0xf] %vm259, %v267
    %278 = vst.msk [vmem:[#allocation6 + $0x8] sm:$0xf] %vm259, %v269
    %279 = vst.msk [vmem:[#allocation6 + $0xc] sm:$0xf] %vm259, %v271
    %280 = vrot.lane.b32.xlu0 %v251, 64
    %v281 = vpop.permute.xlu0 %280
    %282 = vrot.lane.b32.xlu0 %v252, 64
    %v283 = vpop.permute.xlu0 %282
    %284 = vrot.lane.b32.xlu0 %v253, 64
    %v285 = vpop.permute.xlu0 %284
    %286 = vrot.lane.b32.xlu0 %v254, 64
    %v287 = vpop.permute.xlu0 %286
    %vm292 = vcmask 519168
    %293 = vst.msk [vmem:[#allocation8] sm:$0xf] %vm292, %v281
    %294 = vst.msk [vmem:[#allocation8 + $0x4] sm:$0xf] %vm292, %v283
    %295 = vst.msk [vmem:[#allocation8 + $0x8] sm:$0xf] %vm292, %v285
    %296 = vst.msk [vmem:[#allocation8 + $0xc] sm:$0xf] %vm292, %v287
    %v297 = vpack.c.bf16 %v182, %v178
    %v298 = vpack.c.bf16 %v192, %v188
    %v301 = vunpack.c.l.b16 %v297
    %v302 = vunpack.c.h.b16 %v297
    %v303 = vunpack.c.l.b16 %v298
    %v304 = vunpack.c.h.b16 %v298
    %v305 = vpack.c.b16 %v301, %v301
    %v306 = vpack.c.b16 %v302, %v302
    %v307 = vpack.c.b16 %v303, %v303
    %v308 = vpack.c.b16 %v304, %v304
    %313 = vst.msk [vmem:[#allocation9] sm:$0xf] %vm292, %v305
    %314 = vst.msk [vmem:[#allocation9 + $0x4] sm:$0xf] %vm292, %v306
    %315 = vst.msk [vmem:[#allocation9 + $0x8] sm:$0xf] %vm292, %v307
    %316 = vst.msk [vmem:[#allocation9 + $0xc] sm:$0xf] %vm292, %v308
    %v317 = vpack.c.bf16 %v232, %v229
    %v318 = vpack.c.bf16 %v240, %v237
    %v319 = vld [vmem:[%s2] sm:$0xf]
    %v320 = vld [vmem:[%s2 + $0x4] sm:$0xf]
    %v321 = vld [vmem:[%s2 + $0x8] sm:$0xf]
    %v322 = vld [vmem:[%s2 + $0xc] sm:$0xf]
    %v323 = vld [vmem:[%s2 + $0x10] sm:$0xf]
    %v324 = vld [vmem:[%s2 + $0x14] sm:$0xf]
    %v325 = vld [vmem:[%s2 + $0x18] sm:$0xf]
    %v326 = vld [vmem:[%s2 + $0x1c] sm:$0xf]
    %v327 = vld [vmem:[%s2 + $0x20] sm:$0xf]
    %v328 = vld [vmem:[%s2 + $0x24] sm:$0xf]
    %v329 = vld [vmem:[%s2 + $0x28] sm:$0xf]
    %v330 = vld [vmem:[%s2 + $0x2c] sm:$0xf]
    %v331 = vld [vmem:[%s2 + $0x30] sm:$0xf]
    %v332 = vld [vmem:[%s2 + $0x34] sm:$0xf]
    %v333 = vld [vmem:[%s2 + $0x38] sm:$0xf]
    %v334 = vld [vmem:[%s2 + $0x3c] sm:$0xf]
    %v335 = vld [vmem:[%s3] sm:$0x1]
    %v337 = vlaneseq
    %v338 = vshrl.u32 %v337, 7
    %v339 = vsub.s32 0, %v338
    %v340 = vrot.slane %v335, %v339
    %344 = vrot.lane.b32.xlu0 %v297, 64
    %v345 = vpop.permute.xlu0 %344
    %346 = vrot.lane.b32.xlu0 %v317, 64
    %v347 = vpop.permute.xlu0 %346
    %348 = vrot.lane.b32.xlu0 %v298, 64
    %v349 = vpop.permute.xlu0 %348
    %350 = vrot.lane.b32.xlu0 %v318, 64
    %v351 = vpop.permute.xlu0 %350
    %vm352 = vcmask 523264
    %v353 = vsel %vm352, %v345, %v347
    %v354 = vsel %vm352, %v349, %v351
    %v373 = vunpack.c.l.b16 %v319
    %v374 = vunpack.c.l.b16 %v320
    %v375 = vunpack.c.l.b16 %v321
    %v376 = vunpack.c.l.b16 %v322
    %v377 = vunpack.c.l.b16 %v323
    %v378 = vunpack.c.l.b16 %v324
    %v379 = vunpack.c.l.b16 %v325
    %v380 = vunpack.c.l.b16 %v326
    %v381 = vunpack.c.l.b16 %v327
    %v382 = vunpack.c.l.b16 %v328
    %v383 = vunpack.c.l.b16 %v329
    %v384 = vunpack.c.l.b16 %v330
    %v385 = vunpack.c.l.b16 %v331
    %v386 = vunpack.c.l.b16 %v332
    %v387 = vunpack.c.l.b16 %v333
    %v388 = vunpack.c.l.b16 %v334
    %v389 = vpack.c.b16 %v374, %v373
    %v390 = vpack.c.b16 %v376, %v375
    %v391 = vpack.c.b16 %v378, %v377
    %v392 = vpack.c.b16 %v380, %v379
    %v393 = vpack.c.b16 %v382, %v381
    %v394 = vpack.c.b16 %v384, %v383
    %v395 = vpack.c.b16 %v386, %v385
    %v396 = vpack.c.b16 %v388, %v387
    %405 = vmatprep.subr.bf16.mxu0 0
    %406 = vmatpush1.bf16.msra.mxu0 %v396
    %407 = vmatprep.subr.bf16.mxu0 0
    %408 = vmatpush1.bf16.msra.mxu0 %v395
    %409 = vmatprep.subr.bf16.mxu0 0
    %410 = vmatpush1.bf16.msra.mxu0 %v394
    %411 = vmatprep.subr.bf16.mxu0 0
    %412 = vmatpush1.bf16.msra.mxu0 %v393
    %413 = vmatprep.subr.bf16.mxu0 0
    %414 = vmatpush1.bf16.msra.mxu0 %v392
    %415 = vmatprep.subr.bf16.mxu0 0
    %416 = vmatpush1.bf16.msra.mxu0 %v391
    %417 = vmatprep.subr.bf16.mxu0 0
    %418 = vmatpush1.bf16.msra.mxu0 %v390
    %419 = vmatprep.subr.bf16.mxu0 0
    %420 = vmatpush1.bf16.msra.mxu0 %v389
    %421 = vmatprep.subr.bf16.mxu0 0
    %422 = vmatpush2.bf16.msra.mxu0 0
    %423 = vmatprep.subr.bf16.mxu0 0
    %424 = vmatpush2.bf16.msra.mxu0 0
    %425 = vmatprep.subr.bf16.mxu0 0
    %426 = vmatpush2.bf16.msra.mxu0 0
    %427 = vmatprep.subr.bf16.mxu0 0
    %428 = vmatpush2.bf16.msra.mxu0 0
    %429 = vmatprep.subr.bf16.mxu0 0
    %430 = vmatpush2.bf16.msra.mxu0 0
    %431 = vmatprep.subr.bf16.mxu0 0
    %432 = vmatpush2.bf16.msra.mxu0 0
    %433 = vmatprep.subr.bf16.mxu0 0
    %434 = vmatpush2.bf16.msra.mxu0 0
    %435 = vmatprep.subr.bf16.mxu0 0
    %436 = vmatpush2.bf16.msra.mxu0 0
    %437 = vmatprep.mubr.bf16.mxu0 0
    %438 = vmatmul.mubr.bf16.gmra.mxu0 %v353
    %v439 = vpop.f32.mrf.mxu0
    %v440 = vadd.f32 %v340, %v439
    %v441 = vpop.f32.mrf.mxu0
    %v442 = vpop.f32.mrf.mxu0
    %v443 = vadd.f32 %v340, %v442
    %v444 = vpop.f32.mrf.mxu0
    %445 = vmatprep.mubr.bf16.mxu0 0
    %446 = vmatmul.mubr.bf16.gmra.mxu0 %v354
    %v447 = vpop.f32.mrf.mxu0
    %v448 = vadd.f32 %v340, %v447
    %v449 = vpop.f32.mrf.mxu0
    %v450 = vpop.f32.mrf.mxu0
    %v451 = vadd.f32 %v340, %v450
    %v452 = vpop.f32.mrf.mxu0
    %453 = vdwg.mxu0
    %v454 = vpack.c.bf16 %v443, %v440
    %v455 = vpack.c.bf16 %v451, %v448
    %v458 = vunpack.c.l.b16 %v454
    %v459 = vunpack.c.h.b16 %v454
    %v460 = vunpack.c.l.b16 %v455
    %v461 = vunpack.c.h.b16 %v455
    %v462 = vpack.c.b16 %v458, %v458
    %v463 = vpack.c.b16 %v459, %v459
    %v464 = vpack.c.b16 %v460, %v460
    %v465 = vpack.c.b16 %v461, %v461
    %470 = vst.msk [vmem:[#allocation11] sm:$0xf] %vm259, %v462
    %471 = vst.msk [vmem:[#allocation11 + $0x4] sm:$0xf] %vm259, %v463
    %472 = vst.msk [vmem:[#allocation11 + $0x8] sm:$0xf] %vm259, %v464
    %473 = vst.msk [vmem:[#allocation11 + $0xc] sm:$0xf] %vm259, %v465
    // Predicated region
    $region22: #{tpu_custom_call.1} parent=1 // pred_check
      _
    $region23: #{tpu_custom_call.1} parent=1 // pred_check_branch
      %475 = sbr.rel (0) target = $region25
    $region24: #{tpu_custom_call.1} parent=1 // pred_region
      %s477 = ssub.s32 256, 256
      %478 = vsyncadd [#allocation4], %s477
      %s479 = sshll.u32 [#allocation5], 4
      %s480 = int_to_ptr.vmem [resolvable:$true] %s479
      %485 = dma.vmem_to_hbm [thread:$0]  %s480, 256, %s4, [#allocation4], 64, 64, 4
    $region25: #{tpu_custom_call.1} parent=1 // pred_fallthru
      _
    // Predicated region
    $region26: #{tpu_custom_call.1} parent=1 // pred_check
      _
    $region27: #{tpu_custom_call.1} parent=1 // pred_check_branch
      %487 = sbr.rel (0) target = $region29
    $region28: #{tpu_custom_call.1} parent=1 // pred_region
      %s489 = ssub.s32 256, 256
      %490 = vsyncadd [#allocation7], %s489
      %s491 = sshll.u32 [#allocation6], 4
      %s492 = int_to_ptr.vmem [resolvable:$true] %s491
      %497 = dma.vmem_to_hbm [thread:$0]  %s492, 256, %s5, [#allocation7], 64, 64, 4
    $region29: #{tpu_custom_call.1} parent=1 // pred_fallthru
      _
    // Predicated region
    $region30: #{tpu_custom_call.1} parent=1 // pred_check
      _
    $region31: #{tpu_custom_call.1} parent=1 // pred_check_branch
      %499 = sbr.rel (0) target = $region33
    $region32: #{tpu_custom_call.1} parent=1 // pred_region
      %s501 = ssub.s32 256, 256
      %502 = vsyncadd [#allocation7], %s501
      %s503 = sshll.u32 [#allocation8], 4
      %s504 = int_to_ptr.vmem [resolvable:$true] %s503
      %509 = dma.vmem_to_hbm [thread:$0]  %s504, 256, %s6, [#allocation7], 64, 64, 4
    $region33: #{tpu_custom_call.1} parent=1 // pred_fallthru
      _
    // Predicated region
    $region34: #{tpu_custom_call.1} parent=1 // pred_check
      _
    $region35: #{tpu_custom_call.1} parent=1 // pred_check_branch
      %511 = sbr.rel (0) target = $region37
    $region36: #{tpu_custom_call.1} parent=1 // pred_region
      %s513 = ssub.s32 256, 256
      %514 = vsyncadd [#allocation10], %s513
      %s515 = sshll.u32 [#allocation9], 4
      %s516 = int_to_ptr.vmem [resolvable:$true] %s515
      %521 = dma.vmem_to_hbm [thread:$0]  %s516, 256, %s7, [#allocation10], 64, 64, 4
    $region37: #{tpu_custom_call.1} parent=1 // pred_fallthru
      _
    // Predicated region
    $region38: #{tpu_custom_call.1} parent=1 // pred_check
      _
    $region39: #{tpu_custom_call.1} parent=1 // pred_check_branch
      %523 = sbr.rel (0) target = $region41
    $region40: #{tpu_custom_call.1} parent=1 // pred_region
      %s525 = ssub.s32 256, 256
      %526 = vsyncadd [#allocation10], %s525
      %s527 = sshll.u32 [#allocation11], 4
      %s528 = int_to_ptr.vmem [resolvable:$true] %s527
      %533 = dma.vmem_to_hbm [thread:$0]  %s528, 256, %s8, [#allocation10], 64, 64, 4
    $region41: #{tpu_custom_call.1} parent=1 // pred_fallthru
      _
    // Predicated region
    $region42: #{tpu_custom_call.1} parent=1 // pred_check
      _
    $region43: #{tpu_custom_call.1} parent=1 // pred_check_branch
      %535 = sbr.rel (0) target = $region45
    $region44: #{tpu_custom_call.1} parent=1 // pred_region
      %536 = dma.done [#allocation4], 256
    $region45: #{tpu_custom_call.1} parent=1 // pred_fallthru
      _
    // Predicated region
    $region46: #{tpu_custom_call.1} parent=1 // pred_check
      _
    $region47: #{tpu_custom_call.1} parent=1 // pred_check_branch
      %538 = sbr.rel (0) target = $region49
    $region48: #{tpu_custom_call.1} parent=1 // pred_region
      %539 = dma.done [#allocation7], 256
    $region49: #{tpu_custom_call.1} parent=1 // pred_fallthru
      _
    // Predicated region
    $region50: #{tpu_custom_call.1} parent=1 // pred_check
      _
    $region51: #{tpu_custom_call.1} parent=1 // pred_check_branch
      %541 = sbr.rel (0) target = $region53
    $region52: #{tpu_custom_call.1} parent=1 // pred_region
      %542 = dma.done [#allocation7], 256
    $region53: #{tpu_custom_call.1} parent=1 // pred_fallthru
      _
    // Predicated region
    $region54: #{tpu_custom_call.1} parent=1 // pred_check
      _
    $region55: #{tpu_custom_call.1} parent=1 // pred_check_branch
      %544 = sbr.rel (0) target = $region57
    $region56: #{tpu_custom_call.1} parent=1 // pred_region
      %545 = dma.done [#allocation10], 256
    $region57: #{tpu_custom_call.1} parent=1 // pred_fallthru
      _
    // Predicated region
    $region58: #{tpu_custom_call.1} parent=1 // pred_check
      _
    $region59: #{tpu_custom_call.1} parent=1 // pred_check_branch
      %547 = sbr.rel (0) target = $region61
    $region60: #{tpu_custom_call.1} parent=1 // pred_region
      %548 = dma.done [#allocation10], 256
    $region61: #{tpu_custom_call.1} parent=1 // pred_fallthru
      _
    %549 = vsyncpa [#allocation3], 1
    %550 = vsyncpa [#allocation4], 1
    %551 = vsyncpa [#allocation7], 1
    %552 = vsyncpa [#allocation10], 1

</llo_original>
